<compile_context>
chip_gen: v7x
topology: tpu7x:2x2x1
jax: 0.10.0
libtpu: 0.0.40
codegen_flags: <defaults>
</compile_context>

<pallas_src>
import jax
import jax.numpy as jnp
from jax.experimental import pallas as pl
from jax.experimental.pallas import tpu as pltpu


def _round_up(x, m):
    return ((x + m - 1) // m) * m


def _choose_tile_rows(n, max_tile_rows):
    """Pick the row tile: as big as possible, >=2 tiles for large n (v7x)."""
    max_tile_rows = max(128, _round_up(max_tile_rows, 128))
    if n <= 1024:
        # Small problems: one tile with minimal padding (grid-step overhead
        # dwarfs any megacore benefit at this size).
        return min(max_tile_rows, _round_up(n, 128))
    # Large problems: biggest tile that still yields >= 2 grid steps so the
    # "parallel" grid axis can be split across both TensorCores on v7x.
    return min(max_tile_rows, _round_up((n + 1) // 2, 128))


def _unifont_fused_kernel(qr_ref, table_t_ref, out_ref):
    """One grid step: gather TILE fused-table rows via a one-hot MXU matmul.

    qr_ref      : [1, 1, TILE] int32   lane-dense symbol indices for this tile
    table_t_ref : [D, S_pad]   float32 (symbols_repr @ W^T + b)^T, zero-padded
    out_ref     : [TILE, D]    float32
    """
    idx = qr_ref[0]                                     # [1, TILE], lane-resident
    s_pad = table_t_ref.shape[1]
    tile = idx.shape[1]

    # Transposed one-hot built directly in the index's lane-resident layout
    # (sublane broadcast of idx; no cross-lane index relayout needed):
    #   onehot_t[s, t] = (QR[t] == s)        exactly 0.0 / 1.0
    sym_ids = jax.lax.broadcasted_iota(jnp.int32, (s_pad, tile), 0)
    onehot_t = (sym_ids == idx).astype(jnp.float32)     # [S_pad, TILE]

    # Embedding gather + Linear (+bias) as one MXU matmul; the Linear and bias
    # were folded into table_t in the wrapper.  [D, S_pad] @ [S_pad, TILE].
    out_t = jnp.dot(table_t_ref[...], onehot_t,
                    preferred_element_type=jnp.float32)  # [D, TILE]

    # One 32-bit XLU transpose back to the row-major [TILE, D] output slab.
    out_ref[...] = jnp.transpose(out_t, (1, 0))


def unifont_forward(qr, symbols_repr, weight_t, bias, *,
                    max_tile_rows=2048, min_rows_for_pallas=512):
    """Pallas implementation of UnifontModule.forward.

    qr:           [B, T] integer indices
    symbols_repr: [S, F] float32 (F = 256 flattened unifont bitmaps; row 0 zeros)
    weight_t:     [F, D] float32 (torch Linear weight, transposed)
    bias:         [D]    float32
    returns:      [B, T, D] float32
    """
    B, T = qr.shape
    S, F = symbols_repr.shape
    D = weight_t.shape[1]

    # ---- Static precompute: fold Linear AND bias into the symbol table. ----
    fused = jnp.dot(symbols_repr.astype(jnp.float32),
                    weight_t.astype(jnp.float32),
                    precision=jax.lax.Precision.HIGHEST)
    fused = fused + bias.astype(jnp.float32)[None, :]            # [S, D]
    s_pad = _round_up(max(S, 8), 128)
    fused = jnp.pad(fused, ((0, s_pad - S), (0, 0)))             # [S_pad, D] f32

    n = B * T
    qr_flat = qr.reshape(n).astype(jnp.int32)

    # ---- Small-N fast path: plain XLA gather beats kernel launch overhead. ----
    if n < min_rows_for_pallas:
        return jnp.take(fused, qr_flat, axis=0).reshape(B, T, D)

    # ---- Row tiling. ----
    tile_rows = _choose_tile_rows(n, max_tile_rows)
    num_tiles = (n + tile_rows - 1) // tile_rows
    n_pad = num_tiles * tile_rows

    # Lane-dense index stream: one contiguous [1, tile_rows] int32 row per grid
    # step (contiguous DMA burst, no 1->128 lane padding in VMEM).
    qr_lanes = jnp.pad(qr_flat, (0, n_pad - n)).reshape(num_tiles, 1, tile_rows)

    # Table fed pre-transposed so the in-kernel matmul is in canonical
    # [M, K] @ [K, N] orientation with the one-hot as the lane-wide RHS.
    table_t = jnp.transpose(fused, (1, 0))                       # [D, S_pad] f32

    grid_spec = pltpu.PrefetchScalarGridSpec(
        num_scalar_prefetch=0,
        grid=(num_tiles,),
        in_specs=[
            pl.BlockSpec((1, 1, tile_rows), lambda i: (i, 0, 0)),  # indices
            pl.BlockSpec((D, s_pad), lambda i: (0, 0)),            # fused table
        ],
        out_specs=pl.BlockSpec((tile_rows, D), lambda i: (i, 0)),
    )

    cost = pl.CostEstimate(
        flops=2 * n_pad * s_pad * D,
        transcendentals=0,
        bytes_accessed=(n_pad * 4            # int32 indices
                        + s_pad * D * 4      # f32 fused table (fetched once)
                        + n_pad * D * 4),    # f32 output
    )

    out_flat = pl.pallas_call(
        _unifont_fused_kernel,
        out_shape=jax.ShapeDtypeStruct((n_pad, D), jnp.float32),
        grid_spec=grid_spec,
        compiler_params=pltpu.CompilerParams(
            dimension_semantics=("parallel",),
        ),
        cost_estimate=cost,
    )(qr_lanes, table_t)

    return out_flat[:n].reshape(B, T, D)


def reference_forward(qr, symbols_repr, weight_t, bias):
    gathered = symbols_repr[qr]                                   # [B, T, F]
    return jnp.dot(gathered, weight_t,
                   precision=jax.lax.Precision.HIGHEST) + bias    # [B, T, D]


if __name__ == "__main__":
    key = jax.random.PRNGKey(0)

    # Synthetic "alphabet" of 52 characters -> 52 + 1 zero row = 53 symbols,
    # each a flattened 16x16 unifont bitmap (256 features).
    alphabet_size = 52
    S = alphabet_size + 1
    F = 16 * 16
    out_dim = 32

    k_sym, k_w, k_b, k_qr, k_qr2 = jax.random.split(key, 5)

    # Symbol table: binary bitmaps; row 0 forced to zeros (as in __init__).
    symbols = (jax.random.uniform(k_sym, (S, F)) > 0.5).astype(jnp.float32)
    symbols = symbols.at[0].set(0.0)

    # Deterministic Linear params (torch Linear: weight [out_dim, F], bias [out_dim]).
    bound = 1.0 / (F ** 0.5)
    weight = jax.random.uniform(k_w, (out_dim, F), minval=-bound, maxval=bound)
    bias = jax.random.uniform(k_b, (out_dim,), minval=-bound, maxval=bound)
    weight_t = weight.T.astype(jnp.float32)                      # [F, out_dim]
    bias = bias.astype(jnp.float32)

    # ---- 1) Small demo shape from the module spec (batch=2, seq=8), with the
    #         Pallas kernel forced (pads to a single 128-row tile). ----
    B, T = 2, 8
    qr = jax.random.randint(k_qr, (B, T), minval=0, maxval=S, dtype=jnp.int32)
    ref_small = reference_forward(qr, symbols, weight_t, bias)

    out_small = unifont_forward(qr, symbols, weight_t, bias, min_rows_for_pallas=0)
    out_small = jax.block_until_ready(out_small)
    assert out_small.shape == (B, T, out_dim)
    assert jnp.allclose(out_small, ref_small, atol=1e-2, rtol=1e-2), float(
        jnp.max(jnp.abs(out_small - ref_small)))

    # ---- 2) Default wrapper at this tiny size takes the XLA fast path. ----
    out_fast = jax.block_until_ready(unifont_forward(qr, symbols, weight_t, bias))
    assert jnp.allclose(out_fast, ref_small, atol=1e-2, rtol=1e-2)

    # ---- 3) Larger case: 2 grid steps of 2048 rows (big tiles, tail padding,
    #         and >= 2 tiles so v7x megacore sharding can engage). ----
    B2, T2 = 4, 1000
    qr2 = jax.random.randint(k_qr2, (B2, T2), minval=0, maxval=S, dtype=jnp.int32)
    out_big = jax.block_until_ready(unifont_forward(qr2, symbols, weight_t, bias))
    ref_big = reference_forward(qr2, symbols, weight_t, bias)
    assert out_big.shape == (B2, T2, out_dim)
    assert jnp.allclose(out_big, ref_big, atol=1e-2, rtol=1e-2), float(
        jnp.max(jnp.abs(out_big - ref_big)))

    print("KERNEL_OK")
</pallas_src>

<mosaic_0001>
module attributes {stable_mosaic.version = 11 : i64} {
  func.func @_unifont_fused_kernel(%arg0: i32, %arg1: memref<1x1x128xi32, #tpu.memory_space<vmem>>, %arg2: memref<32x128xf32, #tpu.memory_space<vmem>>, %arg3: memref<128x32xf32, #tpu.memory_space<vmem>>) attributes {dimension_semantics = [#tpu.dimension_semantics<parallel>], iteration_bounds = array<i64: 1>, scalar_prefetch = 0 : i64, scratch_operands = 0 : i64, tpu.core_type = #tpu.core_type<tc>, window_params = [{transform_indices = @transform_0, window_bounds = array<i64: 1, 1, 128>}, {pipeline_mode = #tpu.pipeline_mode<synchronous>, transform_indices = @transform_1, window_bounds = array<i64: 32, 128>}, {transform_indices = @transform_2, window_bounds = array<i64: 128, 32>}]} {
    %c0 = arith.constant 0 : index
    %c0_0 = arith.constant 0 : index
    %c0_1 = arith.constant 0 : index
    %0 = vector.load %arg1[%c0, %c0_0, %c0_1] : memref<1x1x128xi32, #tpu.memory_space<vmem>>, vector<1x1x128xi32>
    %1 = vector.shape_cast %0 : vector<1x1x128xi32> to vector<1x128xi32>
    %2 = tpu.iota {dimensions = array<i32: 0>} : vector<128x128xi32>
    %3 = vector.broadcast %1 : vector<1x128xi32> to vector<128x128xi32>
    %4 = arith.cmpi eq, %2, %3 : vector<128x128xi32>
    %5 = arith.extui %4 : vector<128x128xi1> to vector<128x128xi32>
    %6 = arith.sitofp %5 : vector<128x128xi32> to vector<128x128xf32>
    %c0_2 = arith.constant 0 : index
    %c0_3 = arith.constant 0 : index
    %7 = vector.load %arg2[%c0_2, %c0_3] : memref<32x128xf32, #tpu.memory_space<vmem>>, vector<32x128xf32>
    %cst = arith.constant dense<0.000000e+00> : vector<32x128xf32>
    %8 = tpu.matmul %7, %6, %cst {dimension_numbers = #tpu.dot_dimension_numbers<[1], [0], [0], [1], [0, 0, 1, 1], [], []>} : vector<32x128xf32>, vector<128x128xf32>, vector<32x128xf32> -> vector<32x128xf32>
    %9 = tpu.transpose %8, [1, 0] : vector<32x128xf32> -> vector<128x32xf32>
    %c0_4 = arith.constant 0 : index
    %c0_5 = arith.constant 0 : index
    %10 = vector.load %arg3[%c0_4, %c0_5] : memref<128x32xf32, #tpu.memory_space<vmem>>, vector<128x32xf32>
    tpu.vector_store %arg3[%c0_4, %c0_5], %9 {strides = array<i32>} : memref<128x32xf32, #tpu.memory_space<vmem>>, vector<128x32xf32>,
    return
  }
  func.func @transform_0(%arg0: i32) -> (i32, i32, i32) {
    %c0_i32 = arith.constant 0 : i32
    %c0_i32_0 = arith.constant 0 : i32
    %c0_i32_1 = arith.constant 0 : i32
    return %arg0, %c0_i32, %c0_i32_0 : i32, i32, i32
  }
  func.func @transform_1(%arg0: i32) -> (i32, i32) {
    %c0_i32 = arith.constant 0 : i32
    %c0_i32_0 = arith.constant 0 : i32
    %c0_i32_1 = arith.constant 0 : i32
    return %c0_i32, %c0_i32_0 : i32, i32
  }
  func.func @transform_2(%arg0: i32) -> (i32, i32) {
    %c0_i32 = arith.constant 0 : i32
    %c0_i32_0 = arith.constant 0 : i32
    return %arg0, %c0_i32 : i32, i32
  }
}

</mosaic_0001>

<llo_original>
// kernel: tpu_custom_call.1
$region0: #{tpu_custom_call.1}
  #allocation0 [shape = 'u32[]', space=smem, size = 0x4, offset = 0x4, fixed_abs, tag = 'smem constant byte address 0x4 - core index']
  #allocation1 [shape = 'u32[144,128]{1,0:T(1,128)}', space=vmem, size = 0x12000, scoped, tag = 'internal scratch']
  %s0 = inlined_call_operand.hbm [shape: s32[1,1,128], index: 0, kind: input, shape index: {}]
  %s1 = inlined_call_operand.hbm [shape: f32[32,128], index: 1, kind: input, shape index: {}]
  %s2 = inlined_call_operand.vmem [shape: f32[128,32], index: 2, kind: output, shape index: {}]
  %s3 = sld [smem:[#allocation0]]
  $region26: #{tpu_custom_call.1} parent=0
    _
  %s5 = ssub.s32 1, %s3
  %s6 = scalar_select 0, %s5, %s3
  $region1: #{tpu_custom_call.1} parent=0
    #allocation2 [shape = 'u8[512]{0}', space=vmem, size = 0x400, scoped, tag = 'input window, operand 0, single buffered']
    #allocation3 [shape = 's32[1]{0}', space=sflag, size = 0x4, scoped, tag = 'scoped memory for tpu_custom_call.1']
    #allocation4 [shape = 'u8[16384]{0}', space=vmem, size = 0x4000, scoped, tag = 'input window, operand 1, single buffered']
    #allocation5 [shape = 's32[1]{0}', space=sflag, size = 0x4, scoped, tag = 'scoped memory for tpu_custom_call.1']
    %7 = vsyncpa [#allocation3], 0
    %8 = vsyncpa [#allocation5], 0
    // Predicated region
    $region2: #{tpu_custom_call.1} parent=1 // pred_check
      _
    $region3: #{tpu_custom_call.1} parent=1 // pred_check_branch
      %10 = sbr.rel (0) target = $region5
    $region4: #{tpu_custom_call.1} parent=1 // pred_region
      %s12 = ssub.s32 16, 16
      %13 = vsyncadd [#allocation3], %s12
      %s15 = sshll.u32 [#allocation2], 4
      %s16 = int_to_ptr.vmem [resolvable:$true] %s15
      %18 = dma.hbm_to_vmem [thread:$0]  %s0, 16, %s16, [#allocation3]
    $region5: #{tpu_custom_call.1} parent=1 // pred_fallthru
      _
    // Predicated region
    $region6: #{tpu_custom_call.1} parent=1 // pred_check
      _
    $region7: #{tpu_custom_call.1} parent=1 // pred_check_branch
      %20 = sbr.rel (0) target = $region9
    $region8: #{tpu_custom_call.1} parent=1 // pred_region
      %s22 = ssub.s32 512, 512
      %23 = vsyncadd [#allocation5], %s22
      %s24 = sshll.u32 [#allocation4], 4
      %s25 = int_to_ptr.vmem [resolvable:$true] %s24
      %30 = dma.hbm_to_vmem [thread:$0]  %s1, 512, %s25, [#allocation5], 128, 128, 8
    $region9: #{tpu_custom_call.1} parent=1 // pred_fallthru
      _
    // Predicated region
    $region10: #{tpu_custom_call.1} parent=1 // pred_check
      _
    $region11: #{tpu_custom_call.1} parent=1 // pred_check_branch
      %32 = sbr.rel (0) target = $region13
    $region12: #{tpu_custom_call.1} parent=1 // pred_region
      %33 = dma.done [#allocation3], 16
    $region13: #{tpu_custom_call.1} parent=1 // pred_fallthru
      _
    // Predicated region
    $region14: #{tpu_custom_call.1} parent=1 // pred_check
      _
    $region15: #{tpu_custom_call.1} parent=1 // pred_check_branch
      %35 = sbr.rel (0) target = $region17
    $region16: #{tpu_custom_call.1} parent=1 // pred_region
      %36 = dma.done [#allocation5], 512
    $region17: #{tpu_custom_call.1} parent=1 // pred_fallthru
      _
    %v37 = vld [vmem:[#allocation2] sm:$0x1]
    %v38 = vlaneseq
    %v39 = vshrl.u32 %v38, 7
    %v40 = vadd.s32 %v39, 8
    %v41 = vadd.s32 %v39, 16
    %v42 = vadd.s32 %v39, 24
    %v43 = vadd.s32 %v39, 32
    %v44 = vadd.s32 %v39, 40
    %v45 = vadd.s32 %v39, 48
    %v46 = vadd.s32 %v39, 56
    %v47 = vadd.s32 %v39, 64
    %v48 = vadd.s32 %v39, 72
    %v49 = vadd.s32 %v39, 80
    %v50 = vadd.s32 %v39, 88
    %v51 = vadd.s32 %v39, 96
    %v52 = vadd.s32 %v39, 104
    %v53 = vadd.s32 %v39, 112
    %v54 = vadd.s32 %v39, 120
    %v55 = vlaneseq
    %v56 = vshrl.u32 %v55, 7
    %v57 = vsub.s32 0, %v56
    %v58 = vrot.slane %v37, %v57
    %vm59 = vcmp.eq.s32.totalorder %v39, %v58
    %vm60 = vcmp.eq.s32.totalorder %v40, %v58
    %vm61 = vcmp.eq.s32.totalorder %v41, %v58
    %vm62 = vcmp.eq.s32.totalorder %v42, %v58
    %vm63 = vcmp.eq.s32.totalorder %v43, %v58
    %vm64 = vcmp.eq.s32.totalorder %v44, %v58
    %vm65 = vcmp.eq.s32.totalorder %v45, %v58
    %vm66 = vcmp.eq.s32.totalorder %v46, %v58
    %vm67 = vcmp.eq.s32.totalorder %v47, %v58
    %vm68 = vcmp.eq.s32.totalorder %v48, %v58
    %vm69 = vcmp.eq.s32.totalorder %v49, %v58
    %vm70 = vcmp.eq.s32.totalorder %v50, %v58
    %vm71 = vcmp.eq.s32.totalorder %v51, %v58
    %vm72 = vcmp.eq.s32.totalorder %v52, %v58
    %vm73 = vcmp.eq.s32.totalorder %v53, %v58
    %vm74 = vcmp.eq.s32.totalorder %v54, %v58
    %v75 = vsel %vm59, 1, 0
    %v76 = vsel %vm60, 1, 0
    %v77 = vsel %vm61, 1, 0
    %v78 = vsel %vm62, 1, 0
    %v79 = vsel %vm63, 1, 0
    %v80 = vsel %vm64, 1, 0
    %v81 = vsel %vm65, 1, 0
    %v82 = vsel %vm66, 1, 0
    %v83 = vsel %vm67, 1, 0
    %v84 = vsel %vm68, 1, 0
    %v85 = vsel %vm69, 1, 0
    %v86 = vsel %vm70, 1, 0
    %v87 = vsel %vm71, 1, 0
    %v88 = vsel %vm72, 1, 0
    %v89 = vsel %vm73, 1, 0
    %v90 = vsel %vm74, 1, 0
    %v91 = vcvt.s32.f32 %v75
    %v92 = vcvt.s32.f32 %v76
    %v93 = vcvt.s32.f32 %v77
    %v94 = vcvt.s32.f32 %v78
    %v95 = vcvt.s32.f32 %v79
    %v96 = vcvt.s32.f32 %v80
    %v97 = vcvt.s32.f32 %v81
    %v98 = vcvt.s32.f32 %v82
    %v99 = vcvt.s32.f32 %v83
    %v100 = vcvt.s32.f32 %v84
    %v101 = vcvt.s32.f32 %v85
    %v102 = vcvt.s32.f32 %v86
    %v103 = vcvt.s32.f32 %v87
    %v104 = vcvt.s32.f32 %v88
    %v105 = vcvt.s32.f32 %v89
    %v106 = vcvt.s32.f32 %v90
    %v107 = vld [vmem:[#allocation4] sm:$0xff]
    %v108 = vld [vmem:[#allocation4 + $0x8] sm:$0xff]
    %v109 = vld [vmem:[#allocation4 + $0x10] sm:$0xff]
    %v110 = vld [vmem:[#allocation4 + $0x18] sm:$0xff]
    %111 = vmatprep.subr.mxu0 0.0
    %112 = vmatpush1.msra.mxu0 %v91
    %113 = vmatprep.subr.mxu0 0.0
    %114 = vmatpush1.msra.mxu0 %v92
    %115 = vmatprep.subr.mxu0 0.0
    %116 = vmatpush1.msra.mxu0 %v93
    %117 = vmatprep.subr.mxu0 0.0
    %118 = vmatpush1.msra.mxu0 %v94
    %119 = vmatprep.subr.mxu0 0.0
    %120 = vmatpush1.msra.mxu0 %v95
    %121 = vmatprep.subr.mxu0 0.0
    %122 = vmatpush1.msra.mxu0 %v96
    %123 = vmatprep.subr.mxu0 0.0
    %124 = vmatpush1.msra.mxu0 %v97
    %125 = vmatprep.subr.mxu0 0.0
    %126 = vmatpush1.msra.mxu0 %v98
    %127 = vmatprep.subr.mxu0 0.0
    %128 = vmatpush1.msra.mxu0 %v99
    %129 = vmatprep.subr.mxu0 0.0
    %130 = vmatpush1.msra.mxu0 %v100
    %131 = vmatprep.subr.mxu0 0.0
    %132 = vmatpush1.msra.mxu0 %v101
    %133 = vmatprep.subr.mxu0 0.0
    %134 = vmatpush1.msra.mxu0 %v102
    %135 = vmatprep.subr.mxu0 0.0
    %136 = vmatpush1.msra.mxu0 %v103
    %137 = vmatprep.subr.mxu0 0.0
    %138 = vmatpush1.msra.mxu0 %v104
    %139 = vmatprep.subr.mxu0 0.0
    %140 = vmatpush1.msra.mxu0 %v105
    %141 = vmatprep.subr.mxu0 0.0
    %142 = vmatpush1.msra.mxu0 %v106
    %143 = vmatprep.subr.mxu0 0.0
    %144 = vmatpush1.msra.mxu0 0.0
    %145 = vmatprep.subr.mxu0 0.0
    %146 = vmatpush1.msra.mxu0 0.0
    %147 = vmatprep.subr.mxu0 0.0
    %148 = vmatpush1.msra.mxu0 0.0
    %149 = vmatprep.subr.mxu0 0.0
    %150 = vmatpush1.msra.mxu0 0.0
    %151 = vmatprep.subr.mxu0 0.0
    %152 = vmatpush1.msra.mxu0 0.0
    %153 = vmatprep.subr.mxu0 0.0
    %154 = vmatpush1.msra.mxu0 0.0
    %155 = vmatprep.subr.mxu0 0.0
    %156 = vmatpush1.msra.mxu0 0.0
    %157 = vmatprep.subr.mxu0 0.0
    %158 = vmatpush1.msra.mxu0 0.0
    %159 = vmatprep.subr.mxu0 0.0
    %160 = vmatpush1.msra.mxu0 0.0
    %161 = vmatprep.subr.mxu0 0.0
    %162 = vmatpush1.msra.mxu0 0.0
    %163 = vmatprep.subr.mxu0 0.0
    %164 = vmatpush1.msra.mxu0 0.0
    %165 = vmatprep.subr.mxu0 0.0
    %166 = vmatpush1.msra.mxu0 0.0
    %167 = vmatprep.subr.mxu0 0.0
    %168 = vmatpush1.msra.mxu0 0.0
    %169 = vmatprep.subr.mxu0 0.0
    %170 = vmatpush1.msra.mxu0 0.0
    %171 = vmatprep.subr.mxu0 0.0
    %172 = vmatpush1.msra.mxu0 0.0
    %173 = vmatprep.subr.mxu0 0.0
    %174 = vmatpush1.msra.mxu0 0.0
    %175 = vmatprep.mubr.f32.mxu0 0.0
    %176 = vmatmul.mubr.f32.gmra.mrb[0].mxu0 %v107
    %v177 = vpop.f32.mrb[0].mxu0
    %v178 = vadd.f32 0.0, %v177
    %v179 = vpop.f32.mrb[0].mxu0
    %180 = vmatprep.mubr.f32.mxu0 0.0
    %181 = vmatmul.mubr.f32.gmra.mrb[0].mxu0 %v108
    %v182 = vpop.f32.mrb[0].mxu0
    %v183 = vadd.f32 0.0, %v182
    %v184 = vpop.f32.mrb[0].mxu0
    %185 = vmatprep.mubr.f32.mxu0 0.0
    %186 = vmatmul.mubr.f32.gmra.mrb[0].mxu0 %v109
    %v187 = vpop.f32.mrb[0].mxu0
    %v188 = vadd.f32 0.0, %v187
    %v189 = vpop.f32.mrb[0].mxu0
    %190 = vmatprep.mubr.f32.mxu0 0.0
    %191 = vmatmul.mubr.f32.gmra.mrb[0].mxu0 %v110
    %v192 = vpop.f32.mrb[0].mxu0
    %v193 = vadd.f32 0.0, %v192
    %v194 = vpop.f32.mrb[0].mxu0
    %195 = vdwg.mxu0
    %196 = vxpose.xlu0.b32.start [1/16] %v178, 128
    %197 = vxpose.xlu0.b32.cont [2/16] %v183, 128
    %198 = vxpose.xlu0.b32.cont [3/16] %v188, 128
    %199 = vxpose.xlu0.b32.cont [4/16] %v193, 128
    %200 = vxpose.xlu0.b32.cont [5/16] 0.0, 128
    %201 = vxpose.xlu0.b32.cont [6/16] 0.0, 128
    %202 = vxpose.xlu0.b32.cont [7/16] 0.0, 128
    %203 = vxpose.xlu0.b32.cont [8/16] 0.0, 128
    %204 = vxpose.xlu0.b32.cont [9/16] 0.0, 128
    %205 = vxpose.xlu0.b32.cont [10/16] 0.0, 128
    %206 = vxpose.xlu0.b32.cont [11/16] 0.0, 128
    %207 = vxpose.xlu0.b32.cont [12/16] 0.0, 128
    %208 = vxpose.xlu0.b32.cont [13/16] 0.0, 128
    %209 = vxpose.xlu0.b32.cont [14/16] 0.0, 128
    %210 = vxpose.xlu0.b32.cont [15/16] 0.0, 128
    %211 = vxpose.xlu0.b32.end [16/16] 0.0, 128
    %v212 = vpop.trf.xlu0
    %v213 = vpop.trf.xlu0
    %v214 = vpop.trf.xlu0
    %v215 = vpop.trf.xlu0
    %v216 = vpop.trf.xlu0
    %v217 = vpop.trf.xlu0
    %v218 = vpop.trf.xlu0
    %v219 = vpop.trf.xlu0
    %v220 = vpop.trf.xlu0
    %v221 = vpop.trf.xlu0
    %v222 = vpop.trf.xlu0
    %v223 = vpop.trf.xlu0
    %v224 = vpop.trf.xlu0
    %v225 = vpop.trf.xlu0
    %v226 = vpop.trf.xlu0
    %v227 = vpop.trf.xlu0
    %vm228 = vcmask 261120
    %229 = vst.msk [vmem:[%s2] sm:$0xff] %vm228, %v212
    %230 = vst.msk [vmem:[%s2 + $0x8] sm:$0xff] %vm228, %v213
    %231 = vst.msk [vmem:[%s2 + $0x10] sm:$0xff] %vm228, %v214
    %232 = vst.msk [vmem:[%s2 + $0x18] sm:$0xff] %vm228, %v215
    %233 = vst.msk [vmem:[%s2 + $0x20] sm:$0xff] %vm228, %v216
    %234 = vst.msk [vmem:[%s2 + $0x28] sm:$0xff] %vm228, %v217
    %235 = vst.msk [vmem:[%s2 + $0x30] sm:$0xff] %vm228, %v218
    %236 = vst.msk [vmem:[%s2 + $0x38] sm:$0xff] %vm228, %v219
    %237 = vst.msk [vmem:[%s2 + $0x40] sm:$0xff] %vm228, %v220
    %238 = vst.msk [vmem:[%s2 + $0x48] sm:$0xff] %vm228, %v221
    %239 = vst.msk [vmem:[%s2 + $0x50] sm:$0xff] %vm228, %v222
    %240 = vst.msk [vmem:[%s2 + $0x58] sm:$0xff] %vm228, %v223
    %241 = vst.msk [vmem:[%s2 + $0x60] sm:$0xff] %vm228, %v224
    %242 = vst.msk [vmem:[%s2 + $0x68] sm:$0xff] %vm228, %v225
    %243 = vst.msk [vmem:[%s2 + $0x70] sm:$0xff] %vm228, %v226
    %244 = vst.msk [vmem:[%s2 + $0x78] sm:$0xff] %vm228, %v227
    // Predicated region
    $region18: #{tpu_custom_call.1} parent=1 // pred_check
      _
    $region19: #{tpu_custom_call.1} parent=1 // pred_check_branch
      %246 = sbr.rel (0) target = $region21
    $region20: #{tpu_custom_call.1} parent=1 // pred_region
      _
    $region21: #{tpu_custom_call.1} parent=1 // pred_fallthru
      _
    // Predicated region
    $region22: #{tpu_custom_call.1} parent=1 // pred_check
      _
    $region23: #{tpu_custom_call.1} parent=1 // pred_check_branch
      %248 = sbr.rel (0) target = $region25
    $region24: #{tpu_custom_call.1} parent=1 // pred_region
      _
    $region25: #{tpu_custom_call.1} parent=1 // pred_fallthru
      _
    %249 = vsyncpa [#allocation3], 1
    %250 = vsyncpa [#allocation5], 1

</llo_original>
